<compile_context>
chip_gen: v7x
topology: tpu7x:2x2x1
jax: 0.10.0
libtpu: 0.0.40
codegen_flags: <defaults>
</compile_context>

<pallas_src>
import functools
import numpy as np
import jax
import jax.numpy as jnp
from jax.experimental import pallas as pl
from jax.experimental.pallas import tpu as pltpu


def _round_up(x: int, m: int) -> int:
    return ((x + m - 1) // m) * m


def _policy_kernel(x_ref, w1_ref, w2_ref, w3_ref, const_ref, out_ref,
                   *, h1: int, h2: int, act: int):
    # Packed constants (f32): row 0 = b1, 1 = b2, 2 = b3, 3 = action_scale,
    # 4 = action_bias (zero-filled beyond each row's valid width).
    b1 = const_ref[0:1, :h1]
    b2 = const_ref[1:2, :h2]
    b3 = const_ref[2:3, :act]
    scale = const_ref[3:4, :act]
    bias = const_ref[4:5, :act]

    x = x_ref[...]                                    # [TILE_B, obs_dim] bf16

    # Matmuls on the MXU in bf16, accumulate in f32; elementwise strictly f32
    # (v5e-safe: no bf16 VPU/EUP assumed).
    a1 = jnp.dot(x, w1_ref[...], preferred_element_type=jnp.float32) + b1
    h1v = jnp.tanh(a1)
    a2 = jnp.dot(h1v.astype(jnp.bfloat16), w2_ref[...],
                 preferred_element_type=jnp.float32) + b2
    h2v = jnp.tanh(a2)
    mean = jnp.dot(h2v.astype(jnp.bfloat16), w3_ref[...],
                   preferred_element_type=jnp.float32) + b3

    # Deterministic action: tanh squash, then rescale into [a_min, a_max].
    out_ref[...] = jnp.tanh(mean) * scale + bias


def reference_forward(obsrv, params, action_scale, action_bias):
    """Pure-JAX f32 reference (also the small-batch fallback path)."""
    h = jnp.tanh(obsrv @ params["w1"] + params["b1"])
    h = jnp.tanh(h @ params["w2"] + params["b2"])
    mean = h @ params["w3"] + params["b3"]
    return jnp.tanh(mean) * action_scale + action_bias


def gaussian_policy_forward(obsrv, params, action_scale, action_bias,
                            *, tile_cap: int = 1024,
                            min_pallas_batch: int = 65,
                            force_pallas: bool = False):
    """Fused policy MLP on a batch of observations.

    obsrv:        [B, obsrv_dim] float32
    params:       dict with w1 [obs, h1], b1 [1, h1], w2 [h1, h2], b2 [1, h2],
                  w3 [h2, act], b3 [1, act]   (W stored [in, out], i.e. x @ W + b)
    action_scale: [1, act]    action_bias: [1, act]
    returns:      [B, act] float32 action in environment scale
    """
    obsrv = jnp.asarray(obsrv, jnp.float32)
    B, obs_dim = obsrv.shape
    h1 = params["w1"].shape[1]
    h2 = params["w2"].shape[1]
    act = params["w3"].shape[1]

    # Tiny batches: kernel launch + padding overhead dominates; XLA's fused HLO
    # is at least as fast, so dispatch to pure JAX unless forced.
    if not force_pallas and B < min_pallas_batch:
        return reference_forward(obsrv, params, action_scale, action_bias)

    # Batch tiling: pad the batch only to a multiple of 16 (bf16 sublane
    # packing), then split into >= 2 steps so v7x's two TensorCores both get
    # work.  tile_b caps at tile_cap (per-tile buffers are tiny -- << 1 MiB --
    # so no vmem_limit_bytes tuning is needed on any generation).
    b16 = _round_up(B, 16)
    n_steps = max(2, pl.cdiv(b16, tile_cap))
    tile_b = _round_up(pl.cdiv(b16, n_steps), 16)
    b_pad = tile_b * n_steps

    # Observations: bf16, padded only on batch rows (no lane padding).
    x_p = jnp.zeros((b_pad, obs_dim), jnp.bfloat16)
    x_p = x_p.at[:B, :].set(obsrv.astype(jnp.bfloat16))

    # Weights at natural shapes, bf16 for the MXU fast path.
    w1 = jnp.asarray(params["w1"], jnp.float32).astype(jnp.bfloat16)
    w2 = jnp.asarray(params["w2"], jnp.float32).astype(jnp.bfloat16)
    w3 = jnp.asarray(params["w3"], jnp.float32).astype(jnp.bfloat16)

    # Pack biases + rescale constants into one (8, cmax) f32 block.
    cmax = max(h1, h2, act)
    const = jnp.zeros((8, cmax), jnp.float32)
    const = const.at[0, :h1].set(jnp.asarray(params["b1"], jnp.float32).reshape(-1))
    const = const.at[1, :h2].set(jnp.asarray(params["b2"], jnp.float32).reshape(-1))
    const = const.at[2, :act].set(jnp.asarray(params["b3"], jnp.float32).reshape(-1))
    const = const.at[3, :act].set(jnp.asarray(action_scale, jnp.float32).reshape(-1))
    const = const.at[4, :act].set(jnp.asarray(action_bias, jnp.float32).reshape(-1))

    kernel = functools.partial(_policy_kernel, h1=h1, h2=h2, act=act)

    flops = 2 * b_pad * (obs_dim * h1 + h1 * h2 + h2 * act)
    transcendentals = b_pad * (h1 + h2 + act)
    bytes_accessed = (b_pad * obs_dim * 2                       # bf16 obsrv in
                      + (obs_dim * h1 + h1 * h2 + h2 * act) * 2  # bf16 weights
                      + 8 * cmax * 4                             # const block
                      + b_pad * act * 4)                         # f32 action out

    out = pl.pallas_call(
        kernel,
        out_shape=jax.ShapeDtypeStruct((b_pad, act), jnp.float32),
        grid=(n_steps,),
        in_specs=[
            pl.BlockSpec((tile_b, obs_dim), lambda i: (i, 0)),  # obsrv: batch-tiled
            pl.BlockSpec((obs_dim, h1), lambda i: (0, 0)),      # weights: VMEM-resident
            pl.BlockSpec((h1, h2), lambda i: (0, 0)),
            pl.BlockSpec((h2, act), lambda i: (0, 0)),
            pl.BlockSpec((8, cmax), lambda i: (0, 0)),          # packed constants
        ],
        out_specs=pl.BlockSpec((tile_b, act), lambda i: (i, 0)),
        compiler_params=pltpu.CompilerParams(
            dimension_semantics=("parallel",)),                 # megacore on v7x
        cost_estimate=pl.CostEstimate(flops=flops,
                                      transcendentals=transcendentals,
                                      bytes_accessed=bytes_accessed),
    )(x_p, w1, w2, w3, const)

    # Strip batch padding only (no lane padding to strip).
    return out[:B, :]


def init_params(key, obsrv_dim, mlp_dim, action_dim):
    """Deterministic small-scale initialization of the mean network."""
    dims = [obsrv_dim] + list(mlp_dim) + [action_dim]
    keys = jax.random.split(key, len(dims) - 1)
    params = {}
    for i, (d_in, d_out) in enumerate(zip(dims[:-1], dims[1:])):
        k_w, _ = jax.random.split(keys[i])
        w = (jax.random.normal(k_w, (d_in, d_out), dtype=jnp.float32)
             * (1.0 / np.sqrt(d_in)))
        b = jnp.zeros((1, d_out), dtype=jnp.float32)
        params[f"w{i + 1}"] = w
        params[f"b{i + 1}"] = b
    return params


if __name__ == "__main__":
    # Small shapes consistent with the module's MLP policy.
    obsrv_dim = 16
    mlp_dim = [32, 32]
    action_dim = 4

    key = jax.random.PRNGKey(0)
    k_obs_small, k_obs_big, k_params = jax.random.split(key, 3)

    params = init_params(k_params, obsrv_dim, mlp_dim, action_dim)

    # action_range: (action_dim, 2) array of [min, max] per action dim.
    action_range = np.array(
        [[-1.0, 1.0],
         [-2.0, 2.0],
         [0.0, 1.0],
         [-0.5, 0.5]], dtype=np.float32)
    a_min = jnp.asarray(action_range[:, 0])[None, :]
    a_max = jnp.asarray(action_range[:, 1])[None, :]
    action_scale = (a_max - a_min) / 2.0
    action_bias = (a_max + a_min) / 2.0

    # 1) Small batch, Pallas path forced (exercises the kernel at tiny shapes).
    obs_small = jax.random.normal(k_obs_small, (8, obsrv_dim), dtype=jnp.float32)
    out_small = jax.block_until_ready(
        gaussian_policy_forward(obs_small, params, action_scale, action_bias,
                                force_pallas=True))
    ref_small = reference_forward(obs_small, params, action_scale, action_bias)
    # bf16 MXU operands -> looser tolerance than pure-f32 (still tight for a
    # tanh-squashed, range-bounded policy output).
    np.testing.assert_allclose(np.asarray(out_small), np.asarray(ref_small),
                               rtol=2e-2, atol=2e-2)

    # 2) Larger, non-tile-aligned batch through the default dispatch
    #    (Pallas path, grid of 2 parallel steps, ragged-batch padding).
    obs_big = jax.random.normal(k_obs_big, (200, obsrv_dim), dtype=jnp.float32)
    out_big = jax.block_until_ready(
        gaussian_policy_forward(obs_big, params, action_scale, action_bias))
    ref_big = reference_forward(obs_big, params, action_scale, action_bias)
    np.testing.assert_allclose(np.asarray(out_big), np.asarray(ref_big),
                               rtol=2e-2, atol=2e-2)

    # 3) Tiny batch through the default dispatch (pure-JAX fallback; exact).
    out_fb = jax.block_until_ready(
        gaussian_policy_forward(obs_small, params, action_scale, action_bias))
    np.testing.assert_allclose(np.asarray(out_fb), np.asarray(ref_small),
                               rtol=1e-6, atol=1e-6)

    # TODO(synk): stochastic `sample()` (reparameterized Normal + tanh log-prob
    # correction) is not part of the deterministic forward pass and is omitted.
    print("KERNEL_OK")
</pallas_src>

<mosaic_0001>
module attributes {stable_mosaic.version = 11 : i64} {
  func.func @_policy_kernel(%arg0: i32, %arg1: memref<16x16xbf16, #tpu.memory_space<vmem>>, %arg2: memref<16x32xbf16, #tpu.memory_space<vmem>>, %arg3: memref<32x32xbf16, #tpu.memory_space<vmem>>, %arg4: memref<32x4xbf16, #tpu.memory_space<vmem>>, %arg5: memref<8x32xf32, #tpu.memory_space<vmem>>, %arg6: memref<16x4xf32, #tpu.memory_space<vmem>>) attributes {dimension_semantics = [#tpu.dimension_semantics<parallel>], iteration_bounds = array<i64: 2>, scalar_prefetch = 0 : i64, scratch_operands = 0 : i64, tpu.core_type = #tpu.core_type<tc>, window_params = [{transform_indices = @transform_0, window_bounds = array<i64: 16, 16>}, {pipeline_mode = #tpu.pipeline_mode<synchronous>, transform_indices = @transform_1, window_bounds = array<i64: 16, 32>}, {pipeline_mode = #tpu.pipeline_mode<synchronous>, transform_indices = @transform_2, window_bounds = array<i64: 32, 32>}, {pipeline_mode = #tpu.pipeline_mode<synchronous>, transform_indices = @transform_3, window_bounds = array<i64: 32, 4>}, {pipeline_mode = #tpu.pipeline_mode<synchronous>, transform_indices = @transform_4, window_bounds = array<i64: 8, 32>}, {transform_indices = @transform_5, window_bounds = array<i64: 16, 4>}]} {
    %c0 = arith.constant 0 : index
    %c0_0 = arith.constant 0 : index
    %0 = vector.load %arg5[%c0, %c0_0] : memref<8x32xf32, #tpu.memory_space<vmem>>, vector<1x32xf32>
    %c1 = arith.constant 1 : index
    %c0_1 = arith.constant 0 : index
    %1 = vector.load %arg5[%c1, %c0_1] : memref<8x32xf32, #tpu.memory_space<vmem>>, vector<1x32xf32>
    %c2 = arith.constant 2 : index
    %c0_2 = arith.constant 0 : index
    %2 = vector.load %arg5[%c2, %c0_2] : memref<8x32xf32, #tpu.memory_space<vmem>>, vector<1x4xf32>
    %c3 = arith.constant 3 : index
    %c0_3 = arith.constant 0 : index
    %3 = vector.load %arg5[%c3, %c0_3] : memref<8x32xf32, #tpu.memory_space<vmem>>, vector<1x4xf32>
    %c4 = arith.constant 4 : index
    %c0_4 = arith.constant 0 : index
    %4 = vector.load %arg5[%c4, %c0_4] : memref<8x32xf32, #tpu.memory_space<vmem>>, vector<1x4xf32>
    %c0_5 = arith.constant 0 : index
    %c0_6 = arith.constant 0 : index
    %5 = vector.load %arg1[%c0_5, %c0_6] : memref<16x16xbf16, #tpu.memory_space<vmem>>, vector<16x16xbf16>
    %c0_7 = arith.constant 0 : index
    %c0_8 = arith.constant 0 : index
    %6 = vector.load %arg2[%c0_7, %c0_8] : memref<16x32xbf16, #tpu.memory_space<vmem>>, vector<16x32xbf16>
    %cst = arith.constant dense<0.000000e+00> : vector<16x32xf32>
    %7 = tpu.matmul %5, %6, %cst {dimension_numbers = #tpu.dot_dimension_numbers<[1], [0], [0], [1], [0, 0, 1, 1], [], []>} : vector<16x16xbf16>, vector<16x32xbf16>, vector<16x32xf32> -> vector<16x32xf32>
    %8 = vector.broadcast %0 : vector<1x32xf32> to vector<16x32xf32>
    %9 = arith.addf %7, %8 : vector<16x32xf32>
    %10 = math.tanh %9 : vector<16x32xf32>
    %11 = arith.truncf %10 : vector<16x32xf32> to vector<16x32xbf16>
    %c0_9 = arith.constant 0 : index
    %c0_10 = arith.constant 0 : index
    %12 = vector.load %arg3[%c0_9, %c0_10] : memref<32x32xbf16, #tpu.memory_space<vmem>>, vector<32x32xbf16>
    %cst_11 = arith.constant dense<0.000000e+00> : vector<16x32xf32>
    %13 = tpu.matmul %11, %12, %cst_11 {dimension_numbers = #tpu.dot_dimension_numbers<[1], [0], [0], [1], [0, 0, 1, 1], [], []>} : vector<16x32xbf16>, vector<32x32xbf16>, vector<16x32xf32> -> vector<16x32xf32>
    %14 = vector.broadcast %1 : vector<1x32xf32> to vector<16x32xf32>
    %15 = arith.addf %13, %14 : vector<16x32xf32>
    %16 = math.tanh %15 : vector<16x32xf32>
    %17 = arith.truncf %16 : vector<16x32xf32> to vector<16x32xbf16>
    %c0_12 = arith.constant 0 : index
    %c0_13 = arith.constant 0 : index
    %18 = vector.load %arg4[%c0_12, %c0_13] : memref<32x4xbf16, #tpu.memory_space<vmem>>, vector<32x4xbf16>
    %cst_14 = arith.constant dense<0.000000e+00> : vector<16x4xf32>
    %19 = tpu.matmul %17, %18, %cst_14 {dimension_numbers = #tpu.dot_dimension_numbers<[1], [0], [0], [1], [0, 0, 1, 1], [], []>} : vector<16x32xbf16>, vector<32x4xbf16>, vector<16x4xf32> -> vector<16x4xf32>
    %20 = vector.broadcast %2 : vector<1x4xf32> to vector<16x4xf32>
    %21 = arith.addf %19, %20 : vector<16x4xf32>
    %22 = math.tanh %21 : vector<16x4xf32>
    %23 = vector.broadcast %3 : vector<1x4xf32> to vector<16x4xf32>
    %24 = arith.mulf %22, %23 : vector<16x4xf32>
    %25 = vector.broadcast %4 : vector<1x4xf32> to vector<16x4xf32>
    %26 = arith.addf %24, %25 : vector<16x4xf32>
    %c0_15 = arith.constant 0 : index
    %c0_16 = arith.constant 0 : index
    %27 = vector.load %arg6[%c0_15, %c0_16] : memref<16x4xf32, #tpu.memory_space<vmem>>, vector<16x4xf32>
    tpu.vector_store %arg6[%c0_15, %c0_16], %26 {strides = array<i32>} : memref<16x4xf32, #tpu.memory_space<vmem>>, vector<16x4xf32>,
    return
  }
  func.func @transform_0(%arg0: i32) -> (i32, i32) {
    %c0_i32 = arith.constant 0 : i32
    %c0_i32_0 = arith.constant 0 : i32
    return %arg0, %c0_i32 : i32, i32
  }
  func.func @transform_1(%arg0: i32) -> (i32, i32) {
    %c0_i32 = arith.constant 0 : i32
    %c0_i32_0 = arith.constant 0 : i32
    %c0_i32_1 = arith.constant 0 : i32
    return %c0_i32, %c0_i32_0 : i32, i32
  }
  func.func @transform_2(%arg0: i32) -> (i32, i32) {
    %c0_i32 = arith.constant 0 : i32
    %c0_i32_0 = arith.constant 0 : i32
    %c0_i32_1 = arith.constant 0 : i32
    return %c0_i32, %c0_i32_0 : i32, i32
  }
  func.func @transform_3(%arg0: i32) -> (i32, i32) {
    %c0_i32 = arith.constant 0 : i32
    %c0_i32_0 = arith.constant 0 : i32
    %c0_i32_1 = arith.constant 0 : i32
    return %c0_i32, %c0_i32_0 : i32, i32
  }
  func.func @transform_4(%arg0: i32) -> (i32, i32) {
    %c0_i32 = arith.constant 0 : i32
    %c0_i32_0 = arith.constant 0 : i32
    %c0_i32_1 = arith.constant 0 : i32
    return %c0_i32, %c0_i32_0 : i32, i32
  }
  func.func @transform_5(%arg0: i32) -> (i32, i32) {
    %c0_i32 = arith.constant 0 : i32
    %c0_i32_0 = arith.constant 0 : i32
    return %arg0, %c0_i32 : i32, i32
  }
}

</mosaic_0001>

<llo_original>
// kernel: tpu_custom_call.1
$region0: #{tpu_custom_call.1}
  #allocation0 [shape = 'u32[]', space=smem, size = 0x4, offset = 0x4, fixed_abs, tag = 'smem constant byte address 0x4 - core index']
  #allocation1 [shape = 'u32[144,128]{1,0:T(1,128)}', space=vmem, size = 0x12000, scoped, tag = 'internal scratch']
  %s0 = inlined_call_operand.vmem [shape: bf16[32,16], index: 0, kind: input, shape index: {}]
  %s1 = inlined_call_operand.vmem [shape: bf16[16,32], index: 1, kind: input, shape index: {}]
  %s2 = inlined_call_operand.vmem [shape: bf16[32,32], index: 2, kind: input, shape index: {}]
  %s3 = inlined_call_operand.vmem [shape: bf16[32,4], index: 3, kind: input, shape index: {}]
  %s4 = inlined_call_operand.vmem [shape: f32[8,32], index: 4, kind: input, shape index: {}]
  %s5 = inlined_call_operand.vmem [shape: f32[32,4], index: 5, kind: output, shape index: {}]
  %s6 = sld [smem:[#allocation0]]
  $region53: #{tpu_custom_call.1} parent=0
    _
  %s8 = ssub.s32 1, %s6
  %s9 = scalar_select 0, %s8, %s6
  loop: start=0, step=1, limit=4
  $region2: #{tpu_custom_call.1} parent=0 // loop_pre_header
    _
  $region3: #{tpu_custom_call.1} parent=0 // loop_header
    %s11 = sphi 0, %s15
    %p12 = scmp.ge.s32.totalorder %s11, 4
    %s21 = sphi 0, %s23
    %s24 = sphi 0, %s21
    %s25 = sphi 0, %s24
    %s41 = sphi 0, %s25
    %s45 = sphi 0, %s45
    %s47 = sphi 0, %s45
    %s48 = sphi 0, %s47
    %s62 = sphi 0, %s48
    %s66 = sphi 0, %s66
    %s68 = sphi 0, %s66
    %s69 = sphi 0, %s68
    %s83 = sphi 0, %s69
    %s87 = sphi 0, %s87
    %s89 = sphi 0, %s87
    %s90 = sphi 0, %s89
    %s104 = sphi 0, %s90
    %s108 = sphi 0, %s108
    %s110 = sphi 0, %s108
    %s111 = sphi 0, %s110
    %s125 = sphi 0, %s111
    %s131 = sphi 0, %s133
    %s134 = sphi 0, %s131
    %s135 = sphi 0, %s134
    %s151 = sphi 0, %s135
  $region4: #{tpu_custom_call.1} parent=0 // loop_header_branch
    %14 = sbr.rel (%p12) target = $region8
  $region5: #{tpu_custom_call.1} parent=0 // loop_body
    %s16 = ssub.s32 %s11, 1
    %s17 = ssub.s32 %s11, 2
    %s18 = sadd.s32 %s11, 1
    %s19 = ssub.s32 %s11, %s18
    %p20 = scmp.eq.s32.totalorder %s19, 0
    %s22 = sadd.s32 %s21, 1
    %s23 = scalar_select %p20, %s21, %s22
    %p26 = pneg %p20
    %p27 = scmp.eq.s32.totalorder %s11, 1
    %p28 = por %p26, %p27
    %p29 = scmp.ne.s32.totalorder %s21, %s24
    %p30 = scmp.eq.s32.totalorder %s11, 0
    %p31 = por %p29, %p30
    %p32 = scmp.ne.s32.totalorder %s21, %s24
    %p33 = scmp.eq.s32.totalorder %s16, 1
    %p34 = por %p32, %p33
    %p35 = scmp.ne.s32.totalorder %s24, %s25
    %p36 = scmp.eq.s32.totalorder %s16, 0
    %p37 = por %p35, %p36
    %p38 = scmp.ne.s32.totalorder %s24, %s25
    %p39 = scmp.eq.s32.totalorder %s17, 1
    %p40 = por %p38, %p39
    %p42 = scmp.ne.s32.totalorder %s25, %s41
    %p43 = scmp.eq.s32.totalorder %s17, 0
    %p44 = por %p42, %p43
    %s46 = sadd.s32 %s45, 1
    %p49 = scmp.eq.s32.totalorder %s11, 1
    %p50 = scmp.ne.s32.totalorder %s45, %s47
    %p51 = scmp.eq.s32.totalorder %s11, 0
    %p52 = por %p50, %p51
    %p53 = scmp.ne.s32.totalorder %s45, %s47
    %p54 = scmp.eq.s32.totalorder %s16, 1
    %p55 = por %p53, %p54
    %p56 = scmp.ne.s32.totalorder %s47, %s48
    %p57 = scmp.eq.s32.totalorder %s16, 0
    %p58 = por %p56, %p57
    %p59 = scmp.ne.s32.totalorder %s47, %s48
    %p60 = scmp.eq.s32.totalorder %s17, 1
    %p61 = por %p59, %p60
    %p63 = scmp.ne.s32.totalorder %s48, %s62
    %p64 = scmp.eq.s32.totalorder %s17, 0
    %p65 = por %p63, %p64
    %s67 = sadd.s32 %s66, 1
    %p70 = scmp.eq.s32.totalorder %s11, 1
    %p71 = scmp.ne.s32.totalorder %s66, %s68
    %p72 = scmp.eq.s32.totalorder %s11, 0
    %p73 = por %p71, %p72
    %p74 = scmp.ne.s32.totalorder %s66, %s68
    %p75 = scmp.eq.s32.totalorder %s16, 1
    %p76 = por %p74, %p75
    %p77 = scmp.ne.s32.totalorder %s68, %s69
    %p78 = scmp.eq.s32.totalorder %s16, 0
    %p79 = por %p77, %p78
    %p80 = scmp.ne.s32.totalorder %s68, %s69
    %p81 = scmp.eq.s32.totalorder %s17, 1
    %p82 = por %p80, %p81
    %p84 = scmp.ne.s32.totalorder %s69, %s83
    %p85 = scmp.eq.s32.totalorder %s17, 0
    %p86 = por %p84, %p85
    %s88 = sadd.s32 %s87, 1
    %p91 = scmp.eq.s32.totalorder %s11, 1
    %p92 = scmp.ne.s32.totalorder %s87, %s89
    %p93 = scmp.eq.s32.totalorder %s11, 0
    %p94 = por %p92, %p93
    %p95 = scmp.ne.s32.totalorder %s87, %s89
    %p96 = scmp.eq.s32.totalorder %s16, 1
    %p97 = por %p95, %p96
    %p98 = scmp.ne.s32.totalorder %s89, %s90
    %p99 = scmp.eq.s32.totalorder %s16, 0
    %p100 = por %p98, %p99
    %p101 = scmp.ne.s32.totalorder %s89, %s90
    %p102 = scmp.eq.s32.totalorder %s17, 1
    %p103 = por %p101, %p102
    %p105 = scmp.ne.s32.totalorder %s90, %s104
    %p106 = scmp.eq.s32.totalorder %s17, 0
    %p107 = por %p105, %p106
    %s109 = sadd.s32 %s108, 1
    %p112 = scmp.eq.s32.totalorder %s11, 1
    %p113 = scmp.ne.s32.totalorder %s108, %s110
    %p114 = scmp.eq.s32.totalorder %s11, 0
    %p115 = por %p113, %p114
    %p116 = scmp.ne.s32.totalorder %s108, %s110
    %p117 = scmp.eq.s32.totalorder %s16, 1
    %p118 = por %p116, %p117
    %p119 = scmp.ne.s32.totalorder %s110, %s111
    %p120 = scmp.eq.s32.totalorder %s16, 0
    %p121 = por %p119, %p120
    %p122 = scmp.ne.s32.totalorder %s110, %s111
    %p123 = scmp.eq.s32.totalorder %s17, 1
    %p124 = por %p122, %p123
    %p126 = scmp.ne.s32.totalorder %s111, %s125
    %p127 = scmp.eq.s32.totalorder %s17, 0
    %p128 = por %p126, %p127
    %s129 = ssub.s32 %s11, %s18
    %p130 = scmp.eq.s32.totalorder %s129, 0
    %s132 = sadd.s32 %s131, 1
    %s133 = scalar_select %p130, %s131, %s132
    %p136 = pneg %p130
    %p137 = scmp.eq.s32.totalorder %s11, 1
    %p138 = por %p136, %p137
    %p139 = scmp.ne.s32.totalorder %s131, %s134
    %p140 = scmp.eq.s32.totalorder %s11, 0
    %p141 = por %p139, %p140
    %p142 = scmp.ne.s32.totalorder %s131, %s134
    %p143 = scmp.eq.s32.totalorder %s16, 1
    %p144 = por %p142, %p143
    %p145 = scmp.ne.s32.totalorder %s134, %s135
    %p146 = scmp.eq.s32.totalorder %s16, 0
    %p147 = por %p145, %p146
    %p148 = scmp.ne.s32.totalorder %s134, %s135
    %p149 = scmp.eq.s32.totalorder %s17, 1
    %p150 = por %p148, %p149
    %p152 = scmp.ne.s32.totalorder %s135, %s151
    %p153 = scmp.eq.s32.totalorder %s17, 0
    %p154 = por %p152, %p153
    %p155 = scmp.le.s32.totalorder 1, %s11
    %p156 = scmp.lt.s32.totalorder %s11, 3
    %p157 = pnand %p155, %p156
    %p158 = pneg %p157
    // Predicated region
    $region9: #{tpu_custom_call.1} parent=5 // pred_check
      _
    $region10: #{tpu_custom_call.1} parent=5 // pred_check_branch
      %160 = sbr.rel (%p157) target = $region12
    $region11: #{tpu_custom_call.1} parent=5 // pred_region
      %s161 = ssub.s32 %s11, 1
      // Predicated region
      $region13: #{tpu_custom_call.1} parent=11 // pred_check
        %p162 = pneg %p58
      $region14: #{tpu_custom_call.1} parent=11 // pred_check_branch
        %164 = sbr.rel (%p162) target = $region16
      $region15: #{tpu_custom_call.1} parent=11 // pred_region
        _
      $region16: #{tpu_custom_call.1} parent=11 // pred_fallthru
        _
      // Predicated region
      $region17: #{tpu_custom_call.1} parent=11 // pred_check
        %p165 = pneg %p79
      $region18: #{tpu_custom_call.1} parent=11 // pred_check_branch
        %167 = sbr.rel (%p165) target = $region20
      $region19: #{tpu_custom_call.1} parent=11 // pred_region
        _
      $region20: #{tpu_custom_call.1} parent=11 // pred_fallthru
        _
      // Predicated region
      $region21: #{tpu_custom_call.1} parent=11 // pred_check
        %p168 = pneg %p100
      $region22: #{tpu_custom_call.1} parent=11 // pred_check_branch
        %170 = sbr.rel (%p168) target = $region24
      $region23: #{tpu_custom_call.1} parent=11 // pred_region
        _
      $region24: #{tpu_custom_call.1} parent=11 // pred_fallthru
        _
      // Predicated region
      $region25: #{tpu_custom_call.1} parent=11 // pred_check
        %p171 = pneg %p121
      $region26: #{tpu_custom_call.1} parent=11 // pred_check_branch
        %173 = sbr.rel (%p171) target = $region28
      $region27: #{tpu_custom_call.1} parent=11 // pred_region
        _
      $region28: #{tpu_custom_call.1} parent=11 // pred_fallthru
        _
    $region12: #{tpu_custom_call.1} parent=5 // pred_fallthru
      _
    %p174 = scmp.lt.s32.totalorder %s11, 2
    // Predicated region
    $region29: #{tpu_custom_call.1} parent=5 // pred_check
      %p175 = pneg %p174
    $region30: #{tpu_custom_call.1} parent=5 // pred_check_branch
      %177 = sbr.rel (%p175) target = $region32
    $region31: #{tpu_custom_call.1} parent=5 // pred_region
      // Predicated region
      $region33: #{tpu_custom_call.1} parent=31 // pred_check
        %p178 = pneg %p31
      $region34: #{tpu_custom_call.1} parent=31 // pred_check_branch
        %180 = sbr.rel (%p178) target = $region36
      $region35: #{tpu_custom_call.1} parent=31 // pred_region
        %s181 = smul.u32 2, %s11
        %p182 = scmp.lt.s32.totalorder %s181, 3
        %s183 = scalar_select %p182, %s181, 3
        %s184 = smul.addr %s183, 4
        %s185 = scalar_lea.vmem %s0, %s184
        %s186 = smul.u32 2, %s11
      $region36: #{tpu_custom_call.1} parent=31 // pred_fallthru
        _
    $region32: #{tpu_custom_call.1} parent=5 // pred_fallthru
      _
    %p187 = scmp.le.s32.totalorder 1, %s11
    %p188 = scmp.lt.s32.totalorder %s11, 3
    %p189 = pnand %p187, %p188
    %p190 = pneg %p189
    // Predicated region
    $region37: #{tpu_custom_call.1} parent=5 // pred_check
      _
    $region38: #{tpu_custom_call.1} parent=5 // pred_check_branch
      %192 = sbr.rel (%p189) target = $region40
    $region39: #{tpu_custom_call.1} parent=5 // pred_region
      %s193 = ssub.s32 %s11, 1
      %s194 = smul.u32 2, %s16
      %p195 = scmp.lt.s32.totalorder %s194, 3
      %s196 = scalar_select %p195, %s194, 3
      %s197 = smul.addr %s196, 4
      %s198 = scalar_lea.vmem %s0, %s197
      %p199 = pneg %p37
      %p200 = pneg %p34
      %p201 = pneg %p58
      %p202 = pneg %p55
      %p203 = pneg %p79
      %p204 = pneg %p76
      %p205 = pneg %p100
      %p206 = pneg %p97
      %p207 = pneg %p121
      %p208 = pneg %p118
      %p209 = pneg %p147
      %p210 = pneg %p144
      %s211 = smul.u32 2, %s16
      %p212 = scmp.lt.s32.totalorder %s211, 3
      %s213 = scalar_select %p212, %s211, 3
      %s214 = smul.addr %s213, 8
      %s215 = scalar_lea.vmem %s5, %s214
      %s216 = smul.u32 2, %s16
      %p217 = scmp.lt.s32.totalorder %s216, 3
      %s218 = scalar_select %p217, %s216, 3
      %s219 = smul.addr %s218, 4
      %s220 = scalar_lea.vmem %s0, %s219
      %s221 = smul.u32 2, %s16
      %s222 = smul.u32 2, %s16
      %p223 = scmp.lt.s32.totalorder %s222, 3
      %s224 = scalar_select %p223, %s222, 3
      %s225 = smul.addr %s224, 8
      %s226 = scalar_lea.vmem %s5, %s225
      %s227 = smul.u32 2, %s16
      %v229 = vld [vmem:[%s4] sm:$0x1]
      %v230 = vld [vmem:[%s4 + $0x1] sm:$0x1]
      %v231 = vld [vmem:[%s4 + $0x2] sm:$0x1]
      %v232 = vld [vmem:[%s4 + $0x3] sm:$0x1]
      %v233 = vld [vmem:[%s4 + $0x4] sm:$0x1]
      %v234 = vld [vmem:[%s220] sm:$0xf]
      %v235 = vld [vmem:[%s220 + $0x4] sm:$0xf]
      %v236 = vld [vmem:[%s1] sm:$0xf]
      %v237 = vld [vmem:[%s1 + $0x4] sm:$0xf]
      %v238 = vlaneseq
      %v239 = vshrl.u32 %v238, 7
      %v240 = vsub.s32 0, %v239
      %v241 = vrot.slane %v229, %v240
      %v244 = vunpack.c.l.b16 %v234
      %v245 = vunpack.c.l.b16 %v235
      %v246 = vpack.c.b16 %v245, %v244
      %v249 = vunpack.c.l.b16 %v236
      %v250 = vunpack.c.l.b16 %v237
      %v251 = vpack.c.b16 %v250, %v249
      %vm253 = vcmask 130048
      %v255 = vsel %vm253, %v246, 0
      %257 = vmatprep.subr.bf16.mxu0 0
      %258 = vmatpush1.bf16.msra.mxu0 %v251
      %259 = vmatprep.subr.bf16.mxu0 0
      %260 = vmatpush1.bf16.msra.mxu0 0
      %261 = vmatprep.subr.bf16.mxu0 0
      %262 = vmatpush1.bf16.msra.mxu0 0
      %263 = vmatprep.subr.bf16.mxu0 0
      %264 = vmatpush1.bf16.msra.mxu0 0
      %265 = vmatprep.subr.bf16.mxu0 0
      %266 = vmatpush1.bf16.msra.mxu0 0
      %267 = vmatprep.subr.bf16.mxu0 0
      %268 = vmatpush1.bf16.msra.mxu0 0
      %269 = vmatprep.subr.bf16.mxu0 0
      %270 = vmatpush1.bf16.msra.mxu0 0
      %271 = vmatprep.subr.bf16.mxu0 0
      %272 = vmatpush1.bf16.msra.mxu0 0
      %273 = vmatprep.subr.bf16.mxu0 0
      %274 = vmatpush1.bf16.msra.mxu0 0
      %275 = vmatprep.subr.bf16.mxu0 0
      %276 = vmatpush1.bf16.msra.mxu0 0
      %277 = vmatprep.subr.bf16.mxu0 0
      %278 = vmatpush1.bf16.msra.mxu0 0
      %279 = vmatprep.subr.bf16.mxu0 0
      %280 = vmatpush1.bf16.msra.mxu0 0
      %281 = vmatprep.subr.bf16.mxu0 0
      %282 = vmatpush1.bf16.msra.mxu0 0
      %283 = vmatprep.subr.bf16.mxu0 0
      %284 = vmatpush1.bf16.msra.mxu0 0
      %285 = vmatprep.subr.bf16.mxu0 0
      %286 = vmatpush1.bf16.msra.mxu0 0
      %287 = vmatprep.subr.bf16.mxu0 0
      %288 = vmatpush1.bf16.msra.mxu0 0
      %289 = vmatprep.mubr.bf16.mxu0 0
      %290 = vmatmul.mubr.bf16.gmra.mrb[0].mxu0 %v255
      %v291 = vpop.f32.mrb[0].mxu0
      %v292 = vadd.f32 %v241, %v291
      %v293 = vpop.f32.mrb[0].mxu0
      %v294 = vpop.f32.mrb[0].mxu0
      %v295 = vadd.f32 %v241, %v294
      %v296 = vpop.f32.mrb[0].mxu0
      %297 = vdwg.mxu0
      %v298 = vtanh.pop %v292
      %v299 = vtanh.pop %v295
      %v300 = vpack.c.bf16 %v299, %v298
      %v301 = vld [vmem:[%s2] sm:$0xf]
      %v302 = vld [vmem:[%s2 + $0x4] sm:$0xf]
      %v303 = vld [vmem:[%s2 + $0x8] sm:$0xf]
      %v304 = vld [vmem:[%s2 + $0xc] sm:$0xf]
      %v305 = vlaneseq
      %v306 = vshrl.u32 %v305, 7
      %v307 = vsub.s32 0, %v306
      %v308 = vrot.slane %v230, %v307
      %v313 = vunpack.c.l.b16 %v301
      %v314 = vunpack.c.l.b16 %v302
      %v315 = vunpack.c.l.b16 %v303
      %v316 = vunpack.c.l.b16 %v304
      %v317 = vpack.c.b16 %v314, %v313
      %v318 = vpack.c.b16 %v316, %v315
      %vm321 = vcmask 261120
      %v323 = vsel %vm321, %v300, 0
      %325 = vmatprep.subr.bf16.mxu0 0
      %326 = vmatpush1.bf16.msra.mxu0 %v317
      %327 = vmatprep.subr.bf16.mxu0 0
      %328 = vmatpush1.bf16.msra.mxu0 %v318
      %329 = vmatprep.subr.bf16.mxu0 0
      %330 = vmatpush1.bf16.msra.mxu0 0
      %331 = vmatprep.subr.bf16.mxu0 0
      %332 = vmatpush1.bf16.msra.mxu0 0
      %333 = vmatprep.subr.bf16.mxu0 0
      %334 = vmatpush1.bf16.msra.mxu0 0
      %335 = vmatprep.subr.bf16.mxu0 0
      %336 = vmatpush1.bf16.msra.mxu0 0
      %337 = vmatprep.subr.bf16.mxu0 0
      %338 = vmatpush1.bf16.msra.mxu0 0
      %339 = vmatprep.subr.bf16.mxu0 0
      %340 = vmatpush1.bf16.msra.mxu0 0
      %341 = vmatprep.subr.bf16.mxu0 0
      %342 = vmatpush1.bf16.msra.mxu0 0
      %343 = vmatprep.subr.bf16.mxu0 0
      %344 = vmatpush1.bf16.msra.mxu0 0
      %345 = vmatprep.subr.bf16.mxu0 0
      %346 = vmatpush1.bf16.msra.mxu0 0
      %347 = vmatprep.subr.bf16.mxu0 0
      %348 = vmatpush1.bf16.msra.mxu0 0
      %349 = vmatprep.subr.bf16.mxu0 0
      %350 = vmatpush1.bf16.msra.mxu0 0
      %351 = vmatprep.subr.bf16.mxu0 0
      %352 = vmatpush1.bf16.msra.mxu0 0
      %353 = vmatprep.subr.bf16.mxu0 0
      %354 = vmatpush1.bf16.msra.mxu0 0
      %355 = vmatprep.subr.bf16.mxu0 0
      %356 = vmatpush1.bf16.msra.mxu0 0
      %357 = vmatprep.mubr.bf16.mxu0 0
      %358 = vmatmul.mubr.bf16.gmra.mrb[0].mxu0 %v323
      %v359 = vpop.f32.mrb[0].mxu0
      %v360 = vadd.f32 %v308, %v359
      %v361 = vpop.f32.mrb[0].mxu0
      %v362 = vpop.f32.mrb[0].mxu0
      %v363 = vadd.f32 %v308, %v362
      %v364 = vpop.f32.mrb[0].mxu0
      %365 = vdwg.mxu0
      %v366 = vtanh.pop %v360
      %v367 = vtanh.pop %v363
      %v368 = vpack.c.bf16 %v367, %v366
      %v369 = vld [vmem:[%s3] sm:$0xf]
      %v370 = vld [vmem:[%s3 + $0x4] sm:$0xf]
      %v371 = vld [vmem:[%s3 + $0x8] sm:$0xf]
      %v372 = vld [vmem:[%s3 + $0xc] sm:$0xf]
      %v373 = vlaneseq
      %v374 = vshrl.u32 %v373, 7
      %v375 = vsub.s32 0, %v374
      %v376 = vrot.slane %v231, %v375
      %v381 = vunpack.c.l.b16 %v369
      %v382 = vunpack.c.l.b16 %v370
      %v383 = vunpack.c.l.b16 %v371
      %v384 = vunpack.c.l.b16 %v372
      %v385 = vpack.c.b16 %v382, %v381
      %v386 = vpack.c.b16 %v384, %v383
      %v390 = vsel %vm321, %v368, 0
      %392 = vmatprep.subr.bf16.mxu0 0
      %393 = vmatpush1.bf16.msra.mxu0 %v385
      %394 = vmatprep.subr.bf16.mxu0 0
      %395 = vmatpush1.bf16.msra.mxu0 %v386
      %396 = vmatprep.subr.bf16.mxu0 0
      %397 = vmatpush1.bf16.msra.mxu0 0
      %398 = vmatprep.subr.bf16.mxu0 0
      %399 = vmatpush1.bf16.msra.mxu0 0
      %400 = vmatprep.subr.bf16.mxu0 0
      %401 = vmatpush1.bf16.msra.mxu0 0
      %402 = vmatprep.subr.bf16.mxu0 0
      %403 = vmatpush1.bf16.msra.mxu0 0
      %404 = vmatprep.subr.bf16.mxu0 0
      %405 = vmatpush1.bf16.msra.mxu0 0
      %406 = vmatprep.subr.bf16.mxu0 0
      %407 = vmatpush1.bf16.msra.mxu0 0
      %408 = vmatprep.subr.bf16.mxu0 0
      %409 = vmatpush1.bf16.msra.mxu0 0
      %410 = vmatprep.subr.bf16.mxu0 0
      %411 = vmatpush1.bf16.msra.mxu0 0
      %412 = vmatprep.subr.bf16.mxu0 0
      %413 = vmatpush1.bf16.msra.mxu0 0
      %414 = vmatprep.subr.bf16.mxu0 0
      %415 = vmatpush1.bf16.msra.mxu0 0
      %416 = vmatprep.subr.bf16.mxu0 0
      %417 = vmatpush1.bf16.msra.mxu0 0
      %418 = vmatprep.subr.bf16.mxu0 0
      %419 = vmatpush1.bf16.msra.mxu0 0
      %420 = vmatprep.subr.bf16.mxu0 0
      %421 = vmatpush1.bf16.msra.mxu0 0
      %422 = vmatprep.subr.bf16.mxu0 0
      %423 = vmatpush1.bf16.msra.mxu0 0
      %424 = vmatprep.mubr.bf16.mxu0 0
      %425 = vmatmul.mubr.bf16.gmra.mrb[0].mxu0 %v390
      %v426 = vpop.f32.mrb[0].mxu0
      %v427 = vadd.f32 %v376, %v426
      %v428 = vpop.f32.mrb[0].mxu0
      %v429 = vpop.f32.mrb[0].mxu0
      %v430 = vadd.f32 %v376, %v429
      %v431 = vpop.f32.mrb[0].mxu0
      %432 = vdwg.mxu0
      %v433 = vtanh.pop %v427
      %v434 = vtanh.pop %v430
      %v435 = vlaneseq
      %v436 = vshrl.u32 %v435, 7
      %v437 = vsub.s32 0, %v436
      %v438 = vrot.slane %v232, %v437
      %v439 = vmul.f32 %v433, %v438
      %v440 = vmul.f32 %v434, %v438
      %v441 = vlaneseq
      %v442 = vshrl.u32 %v441, 7
      %v443 = vsub.s32 0, %v442
      %v444 = vrot.slane %v233, %v443
      %v445 = vadd.f32 %v439, %v444
      %v446 = vadd.f32 %v440, %v444
      %vm447 = vcmask 31744
      %448 = vst.msk [vmem:[%s226] sm:$0xff] %vm447, %v445
      %449 = vst.msk [vmem:[%s226 + $0x8] sm:$0xff] %vm447, %v446
      %s450 = smul.u32 2, %s16
      %p451 = scmp.lt.s32.totalorder %s450, 3
      %s452 = scalar_select %p451, %s450, 3
      %s453 = smul.addr %s452, 8
      %s454 = scalar_lea.vmem %s5, %s453
      // Predicated region
      $region41: #{tpu_custom_call.1} parent=39 // pred_check
        %p455 = pneg %p144
      $region42: #{tpu_custom_call.1} parent=39 // pred_check_branch
        %457 = sbr.rel (%p455) target = $region44
      $region43: #{tpu_custom_call.1} parent=39 // pred_region
        %s458 = smul.u32 2, %s16
      $region44: #{tpu_custom_call.1} parent=39 // pred_fallthru
        _
    $region40: #{tpu_custom_call.1} parent=5 // pred_fallthru
      _
    %p459 = scmp.le.s32.totalorder 2, %s11
    // Predicated region
    $region45: #{tpu_custom_call.1} parent=5 // pred_check
      %p460 = pneg %p459
    $region46: #{tpu_custom_call.1} parent=5 // pred_check_branch
      %462 = sbr.rel (%p460) target = $region48
    $region47: #{tpu_custom_call.1} parent=5 // pred_region
      %s463 = ssub.s32 %s11, 2
      // Predicated region
      $region49: #{tpu_custom_call.1} parent=47 // pred_check
        %p464 = pneg %p150
      $region50: #{tpu_custom_call.1} parent=47 // pred_check_branch
        %466 = sbr.rel (%p464) target = $region52
      $region51: #{tpu_custom_call.1} parent=47 // pred_region
        %s467 = smul.u32 2, %s17
        %p468 = scmp.lt.s32.totalorder %s467, 3
        %s469 = scalar_select %p468, %s467, 3
        %s470 = smul.addr %s469, 8
        %s471 = scalar_lea.vmem %s5, %s470
      $region52: #{tpu_custom_call.1} parent=47 // pred_fallthru
        _
    $region48: #{tpu_custom_call.1} parent=5 // pred_fallthru
      _
  $region6: #{tpu_custom_call.1} parent=0 // loop_footer
    %s15 = sadd.s32 1, %s11
  $region7: #{tpu_custom_call.1} parent=0 // loop_footer_branch
    %10 = sbr.rel target = $region3
  $region8: #{tpu_custom_call.1} parent=0 // loop_exit
    _

</llo_original>
